<compile_context>
chip_gen: v7x
topology: tpu7x:2x2x1
jax: 0.10.0
libtpu: 0.0.40
codegen_flags: <defaults>
</compile_context>

<pallas_src>
import jax
import jax.numpy as jnp
from jax.experimental import pallas as pl
from jax.experimental.pallas import tpu as pltpu


def _round_up(x, m):
    return ((x + m - 1) // m) * m


def _tpu_vmem_bytes():
    """Physical VMEM per TensorCore by device generation (conservative default)."""
    try:
        kind = jax.devices()[0].device_kind.lower()
    except Exception:
        kind = ""
    if "v7" in kind:
        return 64 * 1024 * 1024               # v7x: 64 MiB per TC
    if any(t in kind for t in ("v4", "v5", "v6")):
        return 128 * 1024 * 1024              # v4/v5e/v6e: 128 MiB
    return 64 * 1024 * 1024                   # unknown: be conservative


def _vmem_limits():
    phys = _tpu_vmem_bytes()
    # Explicit scoped-VMEM limit (~100 MiB on 128 MiB parts, ~48 MiB on v7x) plus a
    # block budget leaving headroom for compiler-internal scratch.
    limit = min(phys - (16 << 20), 100 << 20)
    budget = int(limit * 0.8)
    return limit, budget


def _largest_divisor_tile(total, align, cap):
    """Largest multiple of `align` that divides `total` and is <= cap (total % align == 0)."""
    cap = max(align, min(cap, total))
    best = align
    t = align
    while t <= cap:
        if total % t == 0:
            best = t
        t += align
    return best


# --------------------------- shared-weight path -----------------------------
# One matmul over M = B * n_vars, tiled on M (parallel) and K = nf (arbitrary).

def _choose_shared_tiles(m_rows, nf, tw_p, xb, wb, ob, align, budget):
    """Pick (tile_m, nf_tile, nf_pad) under the VMEM budget.

    Per-step VMEM (double-buffered pipeline):
      x: 2*tile_m*nf_tile*xb   w: 2*nf_tile*tw_p*wb
      out: 2*tile_m*tw_p*ob    acc: tile_m*tw_p*4    bias: ~2*tw_p*xb
    """
    aligned = (m_rows % align == 0)
    rows_pref = m_rows if not aligned else min(m_rows, 256)

    def max_rows(nf_t):
        fixed = 2 * nf_t * tw_p * wb + 4 * tw_p * xb
        per_row = 2 * nf_t * xb + 2 * tw_p * ob + 4 * tw_p
        avail = budget - fixed
        return int(avail // per_row) if avail > 0 else 0

    if max_rows(nf) >= rows_pref:
        nf_tile, nf_pad = nf, nf                   # whole contraction in one block
    else:
        nf_pad = _round_up(nf, 128)                # K-tiled: lane-aligned K blocks
        nf_tile = 128
        cand = 256
        while cand <= nf_pad:
            if nf_pad % cand == 0 and max_rows(cand) >= rows_pref:
                nf_tile = cand
            cand += 128

    if aligned:
        cap = min(512, max(align, max_rows(nf_tile)), m_rows)
        tile_m = _largest_divisor_tile(m_rows, align, cap)
        # >= 2 parallel M blocks when possible (v7x shares "parallel" axes over 2 TCs).
        if m_rows // tile_m < 2 and m_rows >= 2 * align:
            tile_m = _largest_divisor_tile(m_rows, align, m_rows // 2)
    else:
        tile_m = m_rows                            # single full-dim (legal) M block
    return tile_m, nf_tile, nf_pad


def _shared_kernel(x_ref, w_ref, b_ref, o_ref, acc_ref):
    # x: (tile_m, nf_tile)  w: (nf_tile, tw_p)  b: (1, tw_p)
    # o: (tile_m, tw_p)     acc: (tile_m, tw_p) f32 scratch, resident across K
    @pl.when(pl.program_id(1) == 0)
    def _init():
        acc_ref[...] = jnp.zeros_like(acc_ref)

    acc_ref[...] += jnp.dot(x_ref[...], w_ref[...],
                            preferred_element_type=jnp.float32)

    @pl.when(pl.program_id(1) == pl.num_programs(1) - 1)
    def _finalize():
        o_ref[...] = (acc_ref[...] + b_ref[...].astype(jnp.float32)).astype(o_ref.dtype)


def _flatten_head_shared(xf, weight, bias, B, n_vars, tw):
    # xf: [M, nf] with M = B*n_vars (contiguous reshape of x -- no transpose, no copy)
    M, nf = xf.shape
    xb = xf.dtype.itemsize
    wb = weight.dtype.itemsize
    align = 16 if xb == 2 else 8                   # bf16 packs 16 rows per sublane tile
    tw_p = _round_up(tw, 128)                      # lane-dense output / weight columns
    vmem_limit, budget = _vmem_limits()

    # Row handling: pad only when M is unaligned AND too large for one full-dim block.
    if M % align == 0 or M <= 1024:
        m_rows = M
    else:
        m_rows = _round_up(M, align)               # pads <= align-1 rows

    tile_m, nf_tile, nf_pad = _choose_shared_tiles(
        m_rows, nf, tw_p, xb, wb, xb, align, budget)

    if m_rows != M:
        xf = jnp.pad(xf, ((0, m_rows - M), (0, 0)))
    if nf_pad != nf:
        # Only triggers when K-tiling is needed and nf is not a multiple of 128.
        xf = jnp.pad(xf, ((0, 0), (0, nf_pad - nf)))

    # One-time parameter prep (small next to the x stream): w^T, lane pads, bias row.
    w_t = weight.T
    if nf_pad != nf or tw_p != tw:
        w_t = jnp.pad(w_t, ((0, nf_pad - nf), (0, tw_p - tw)))
    b_p = bias if tw_p == tw else jnp.pad(bias, (0, tw_p - tw))
    b_p = b_p.reshape(1, tw_p)

    num_m = m_rows // tile_m
    num_k = nf_pad // nf_tile

    out = pl.pallas_call(
        _shared_kernel,
        out_shape=jax.ShapeDtypeStruct((m_rows, tw_p), xf.dtype),
        grid_spec=pltpu.PrefetchScalarGridSpec(
            num_scalar_prefetch=0,
            grid=(num_m, num_k),
            in_specs=[
                pl.BlockSpec((tile_m, nf_tile), lambda i, k: (i, k)),
                pl.BlockSpec((nf_tile, tw_p), lambda i, k: (k, 0)),
                pl.BlockSpec((1, tw_p), lambda i, k: (0, 0)),
            ],
            out_specs=pl.BlockSpec((tile_m, tw_p), lambda i, k: (i, 0)),
            scratch_shapes=[pltpu.VMEM((tile_m, tw_p), jnp.float32)],
        ),
        compiler_params=pltpu.CompilerParams(
            dimension_semantics=("parallel", "arbitrary"),
            vmem_limit_bytes=vmem_limit),
    )(xf, w_t, b_p)

    return out[:M, :tw].reshape(B, n_vars, tw)


# --------------------------- individual (per-var) path ----------------------
# Grid over (variable, B tile). x stays in natural layout; weights untransposed,
# unpadded along target_window; each step is a plain 2-D MXU matmul.

def _individual_kernel(x_ref, w_ref, b_ref, o_ref):
    # x: (tile_b, nf_p)  w: (1, tw, nf_p)  b: (1, 1, tw)  o: (1, tile_b, tw)
    acc = jax.lax.dot_general(
        x_ref[...], w_ref[0],
        dimension_numbers=(((1,), (1,)), ((), ())),   # contract last dims (no w.T needed)
        preferred_element_type=jnp.float32)
    o_ref[0] = (acc + b_ref[0].astype(jnp.float32)).astype(o_ref.dtype)


def _flatten_head_individual(x3, weight, bias, B, n_vars, tw):
    # x3: [B, n_vars, nf]; weight: [n_vars, tw, nf]; bias: [n_vars, tw]
    nf = x3.shape[-1]
    xb = x3.dtype.itemsize
    wb = weight.dtype.itemsize
    align = 16 if xb == 2 else 8
    vmem_limit, budget = _vmem_limits()

    # Lane-align the contraction dim (pads only when nf % 128 != 0).
    nf_p = _round_up(nf, 128)
    if nf_p != nf:
        x3 = jnp.pad(x3, ((0, 0), (0, 0), (0, nf_p - nf)))
        weight = jnp.pad(weight, ((0, 0), (0, 0), (0, nf_p - nf)))

    # Budget the B (row) tile; the per-variable weight block stays resident per step.
    fixed = 2 * tw * nf_p * wb + 2 * tw * wb
    per_row = 2 * nf_p * xb + 2 * tw * xb
    avail = budget - fixed
    max_rows = int(avail // per_row) if avail > 0 else align

    if B % align == 0:
        b_rows = B
        tile_b = _largest_divisor_tile(B, align, min(512, max(align, max_rows), B))
    elif B <= 256:
        b_rows, tile_b = B, B                      # single full-dim B block (legal)
    else:
        b_rows = _round_up(B, align)               # pads <= align-1 rows
        x3 = jnp.pad(x3, ((0, b_rows - B), (0, 0), (0, 0)))
        tile_b = _largest_divisor_tile(b_rows, align,
                                       min(512, max(align, max_rows), b_rows))

    # Natural layout: no x transpose.  Free reshape; per-variable column blocks.
    x2 = x3.reshape(b_rows, n_vars * nf_p)
    b3 = bias.reshape(n_vars, 1, tw)

    out_vm = pl.pallas_call(
        _individual_kernel,
        out_shape=jax.ShapeDtypeStruct((n_vars, b_rows, tw), x3.dtype),
        grid_spec=pltpu.PrefetchScalarGridSpec(
            num_scalar_prefetch=0,
            grid=(n_vars, b_rows // tile_b),
            in_specs=[
                pl.BlockSpec((tile_b, nf_p), lambda v, ib: (ib, v)),
                pl.BlockSpec((1, tw, nf_p), lambda v, ib: (v, 0, 0)),
                pl.BlockSpec((1, 1, tw), lambda v, ib: (v, 0, 0)),
            ],
            out_specs=pl.BlockSpec((1, tile_b, tw), lambda v, ib: (v, ib, 0)),
        ),
        compiler_params=pltpu.CompilerParams(
            dimension_semantics=("parallel", "parallel"),
            vmem_limit_bytes=vmem_limit),
    )(x2, weight, b3)

    out = out_vm if b_rows == B else out_vm[:, :B, :]
    # Only a small output-sized reorder remains (out is ~nf/tw times smaller than x).
    return out.transpose(1, 0, 2)                  # [B, n_vars, tw]


# --------------------------------- wrapper -----------------------------------

def flatten_head(x, weight, bias, individual):
    """
    x:      [B, n_vars, d_model, patch_num]
    weight: [n_vars, target_window, nf] if individual else [target_window, nf]
    bias:   [n_vars, target_window]     if individual else [target_window]
    returns [B, n_vars, target_window]

    TODO(synk): if numerics permit, cast x/weights to bf16 here (keeping the f32
    in-kernel accumulation) to halve the dominant HBM stream on all generations.
    """
    B, n_vars, d_model, patch_num = x.shape
    nf = d_model * patch_num
    x3 = x.reshape(B, n_vars, nf)                  # flatten(start_dim=-2): free reshape
    if individual:
        tw = weight.shape[1]
        return _flatten_head_individual(x3, weight, bias, B, n_vars, tw)
    tw = weight.shape[0]
    xf = x3.reshape(B * n_vars, nf)                # contiguous, no transpose
    return _flatten_head_shared(xf, weight, bias, B, n_vars, tw)


def _reference(x, weight, bias, individual):
    B, n_vars, d_model, patch_num = x.shape
    nf = d_model * patch_num
    xf = x.reshape(B, n_vars, nf)
    if individual:
        return jnp.einsum("bif,itf->bit", xf, weight) + bias[None, :, :]
    return jnp.einsum("bif,tf->bit", xf, weight) + bias[None, None, :]


if __name__ == "__main__":
    # Small shapes consistent with the module's forward.
    B, n_vars, d_model, patch_num = 2, 4, 16, 8
    nf = d_model * patch_num                       # 128
    target_window = 32

    key = jax.random.PRNGKey(0)
    kx, kw, kb, kw2, kb2 = jax.random.split(key, 5)

    x = jax.random.normal(kx, (B, n_vars, d_model, patch_num), dtype=jnp.float32)

    # nn.Linear(nf, target_window) convention: weight is [out_features, in_features].
    w_ind = jax.random.normal(kw, (n_vars, target_window, nf), dtype=jnp.float32) * 0.05
    b_ind = jax.random.normal(kb, (n_vars, target_window), dtype=jnp.float32) * 0.05
    w_shared = jax.random.normal(kw2, (target_window, nf), dtype=jnp.float32) * 0.05
    b_shared = jax.random.normal(kb2, (target_window,), dtype=jnp.float32) * 0.05

    # individual = True path
    out_ind = jax.block_until_ready(flatten_head(x, w_ind, b_ind, individual=True))
    ref_ind = _reference(x, w_ind, b_ind, individual=True)
    assert out_ind.shape == (B, n_vars, target_window)
    assert jnp.allclose(out_ind, ref_ind, atol=1e-4, rtol=1e-4)

    # individual = False (shared linear) path
    out_sh = jax.block_until_ready(flatten_head(x, w_shared, b_shared, individual=False))
    ref_sh = _reference(x, w_shared, b_shared, individual=False)
    assert out_sh.shape == (B, n_vars, target_window)
    assert jnp.allclose(out_sh, ref_sh, atol=1e-4, rtol=1e-4)

    print("KERNEL_OK")
</pallas_src>

<mosaic_0001>
module attributes {stable_mosaic.version = 11 : i64} {
  func.func @_individual_kernel(%arg0: i32, %arg1: i32, %arg2: memref<2x128xf32, #tpu.memory_space<vmem>>, %arg3: memref<1x32x128xf32, #tpu.memory_space<vmem>>, %arg4: memref<1x1x32xf32, #tpu.memory_space<vmem>>, %arg5: memref<1x2x32xf32, #tpu.memory_space<vmem>>) attributes {dimension_semantics = [#tpu.dimension_semantics<parallel>, #tpu.dimension_semantics<parallel>], iteration_bounds = array<i64: 4, 1>, scalar_prefetch = 0 : i64, scratch_operands = 0 : i64, tpu.core_type = #tpu.core_type<tc>, window_params = [{transform_indices = @transform_0, window_bounds = array<i64: 2, 128>}, {transform_indices = @transform_1, window_bounds = array<i64: 1, 32, 128>}, {transform_indices = @transform_2, window_bounds = array<i64: 1, 1, 32>}, {transform_indices = @transform_3, window_bounds = array<i64: 1, 2, 32>}]} {
    %c0 = arith.constant 0 : index
    %c0_0 = arith.constant 0 : index
    %0 = vector.load %arg2[%c0, %c0_0] : memref<2x128xf32, #tpu.memory_space<vmem>>, vector<2x128xf32>
    %c0_1 = arith.constant 0 : index
    %c0_2 = arith.constant 0 : index
    %c0_3 = arith.constant 0 : index
    %1 = vector.load %arg3[%c0_1, %c0_2, %c0_3] : memref<1x32x128xf32, #tpu.memory_space<vmem>>, vector<1x32x128xf32>
    %2 = vector.shape_cast %1 : vector<1x32x128xf32> to vector<32x128xf32>
    %cst = arith.constant dense<0.000000e+00> : vector<2x32xf32>
    %3 = tpu.matmul %0, %2, %cst {dimension_numbers = #tpu.dot_dimension_numbers<[1], [1], [0], [0], [0, 0, 1, 0], [], []>} : vector<2x128xf32>, vector<32x128xf32>, vector<2x32xf32> -> vector<2x32xf32>
    %c0_4 = arith.constant 0 : index
    %c0_5 = arith.constant 0 : index
    %c0_6 = arith.constant 0 : index
    %4 = vector.load %arg4[%c0_4, %c0_5, %c0_6] : memref<1x1x32xf32, #tpu.memory_space<vmem>>, vector<1x1x32xf32>
    %5 = vector.shape_cast %4 : vector<1x1x32xf32> to vector<1x32xf32>
    %6 = vector.broadcast %5 : vector<1x32xf32> to vector<2x32xf32>
    %7 = arith.addf %3, %6 : vector<2x32xf32>
    %c0_7 = arith.constant 0 : index
    %c0_8 = arith.constant 0 : index
    %c0_9 = arith.constant 0 : index
    %8 = vector.load %arg5[%c0_7, %c0_8, %c0_9] : memref<1x2x32xf32, #tpu.memory_space<vmem>>, vector<1x2x32xf32>
    %9 = vector.shape_cast %8 : vector<1x2x32xf32> to vector<2x32xf32>
    %10 = vector.shape_cast %7 : vector<2x32xf32> to vector<1x2x32xf32>
    tpu.vector_store %arg5[%c0_7, %c0_8, %c0_9], %10 {strides = array<i32>} : memref<1x2x32xf32, #tpu.memory_space<vmem>>, vector<1x2x32xf32>,
    return
  }
  func.func @transform_0(%arg0: i32, %arg1: i32) -> (i32, i32) {
    %c0_i32 = arith.constant 0 : i32
    return %arg1, %arg0 : i32, i32
  }
  func.func @transform_1(%arg0: i32, %arg1: i32) -> (i32, i32, i32) {
    %c0_i32 = arith.constant 0 : i32
    %c0_i32_0 = arith.constant 0 : i32
    %c0_i32_1 = arith.constant 0 : i32
    return %arg0, %c0_i32, %c0_i32_0 : i32, i32, i32
  }
  func.func @transform_2(%arg0: i32, %arg1: i32) -> (i32, i32, i32) {
    %c0_i32 = arith.constant 0 : i32
    %c0_i32_0 = arith.constant 0 : i32
    %c0_i32_1 = arith.constant 0 : i32
    return %arg0, %c0_i32, %c0_i32_0 : i32, i32, i32
  }
  func.func @transform_3(%arg0: i32, %arg1: i32) -> (i32, i32, i32) {
    %c0_i32 = arith.constant 0 : i32
    %c0_i32_0 = arith.constant 0 : i32
    return %arg0, %arg1, %c0_i32 : i32, i32, i32
  }
}

</mosaic_0001>

<llo_original>
// kernel: tpu_custom_call.1
$region0: #{tpu_custom_call.1}
  #allocation0 [shape = 'u32[]', space=smem, size = 0x4, offset = 0x4, fixed_abs, tag = 'smem constant byte address 0x4 - core index']
  #allocation1 [shape = 'u32[144,128]{1,0:T(1,128)}', space=vmem, size = 0x12000, scoped, tag = 'internal scratch']
  %s0 = inlined_call_operand.hbm [shape: f32[2,512], index: 0, kind: input, shape index: {}]
  %s1 = inlined_call_operand.hbm [shape: f32[4,32,128], index: 1, kind: input, shape index: {}]
  %s2 = inlined_call_operand.vmem [shape: f32[4,1,32], index: 2, kind: input, shape index: {}]
  %s3 = inlined_call_operand.hbm [shape: f32[4,2,32], index: 3, kind: output, shape index: {}]
  %s4 = sld [smem:[#allocation0]]
  $region53: #{tpu_custom_call.1} parent=0
    _
  %s6 = ssub.s32 1, %s4
  %s7 = scalar_select 0, %s6, %s4
  $region1: #{tpu_custom_call.1} parent=0
    #allocation2 [shape = 'u8[2048]{0}', space=vmem, size = 0x800, scoped, tag = 'input window, operand 0']
    #allocation3 [shape = 's32[2]{0}', space=sflag, size = 0x8, scoped, tag = 'scoped memory for tpu_custom_call.1']
    #allocation4 [shape = 's32[2]{0}', space=sflag, size = 0x8, scoped, tag = 'scoped memory for tpu_custom_call.1']
    #allocation5 [shape = 'u8[32768]{0}', space=vmem, size = 0x8000, scoped, tag = 'input window, operand 1']
    #allocation6 [shape = 's32[2]{0}', space=sflag, size = 0x8, scoped, tag = 'scoped memory for tpu_custom_call.1']
    #allocation7 [shape = 'u8[2048]{0}', space=vmem, size = 0x800, scoped, tag = 'output window, operand 0']
    %8 = vsyncpa [#allocation3], 0
    %s9 = scalar_lea.sflag [#allocation3], 1
    %10 = vsyncpa %s9, 0
    %11 = vsyncpa [#allocation6], 0
    %s12 = scalar_lea.sflag [#allocation6], 1
    %13 = vsyncpa %s12, 0
    %14 = vsyncpa [#allocation4], 0
    %s15 = scalar_lea.sflag [#allocation4], 1
    %16 = vsyncpa %s15, 0
    loop: start=0, step=1, limit=6
    $region2: #{tpu_custom_call.1} parent=1 // loop_pre_header
      _
    $region3: #{tpu_custom_call.1} parent=1 // loop_header
      %s18 = sphi 0, %s22
      %p19 = scmp.ge.s32.totalorder %s18, 6
      %s25 = sphi 0, %s37
      %s26 = sphi 0, %s33
      %s27 = sphi 0, %s25
      %s28 = sphi 0, %s26
      %s29 = sphi 0, %s27
      %s30 = sphi 0, %s28
      %s42 = sphi 0, %s44
      %s45 = sphi 0, %s42
      %s46 = sphi 0, %s45
      %s62 = sphi 0, %s46
      %s68 = sphi 0, %s70
      %s71 = sphi 0, %s68
      %s72 = sphi 0, %s71
      %s88 = sphi 0, %s72
      %s94 = sphi 0, %s96
      %s97 = sphi 0, %s94
      %s98 = sphi 0, %s97
      %s114 = sphi 0, %s98
      %s122 = sphi 0, %s124
      %s125 = sphi 0, %s122
      %s126 = sphi 0, %s125
      %s142 = sphi 0, %s126
    $region4: #{tpu_custom_call.1} parent=1 // loop_header_branch
      %21 = sbr.rel (%p19) target = $region8
    $region5: #{tpu_custom_call.1} parent=1 // loop_body
      %s23 = ssub.s32 %s18, 1
      %s24 = ssub.s32 %s18, 2
      %s31 = sadd.s32 1, %s26
      %p32 = scmp.ge.s32.totalorder %s31, 1
      %s33 = scalar_select %p32, 0, %s31
      %s34 = sadd.s32 1, %s25
      %s35 = scalar_select %p32, %s34, %s25
      %p36 = scmp.ge.s32.totalorder %s35, 4
      %s37 = scalar_select %p36, 0, %s35
      %s38 = ssub.s32 %s26, %s33
      %s39 = ssub.s32 %s25, %s37
      %s40 = sor.u32 %s38, %s39
      %p41 = scmp.eq.s32.totalorder %s40, 0
      %s43 = sadd.s32 %s42, 1
      %s44 = scalar_select %p41, %s42, %s43
      %p47 = pneg %p41
      %p48 = scmp.eq.s32.totalorder %s18, 3
      %p49 = por %p47, %p48
      %p50 = scmp.ne.s32.totalorder %s42, %s45
      %p51 = scmp.eq.s32.totalorder %s18, 0
      %p52 = por %p50, %p51
      %p53 = scmp.ne.s32.totalorder %s42, %s45
      %p54 = scmp.eq.s32.totalorder %s23, 3
      %p55 = por %p53, %p54
      %p56 = scmp.ne.s32.totalorder %s45, %s46
      %p57 = scmp.eq.s32.totalorder %s23, 0
      %p58 = por %p56, %p57
      %p59 = scmp.ne.s32.totalorder %s45, %s46
      %p60 = scmp.eq.s32.totalorder %s24, 3
      %p61 = por %p59, %p60
      %p63 = scmp.ne.s32.totalorder %s46, %s62
      %p64 = scmp.eq.s32.totalorder %s24, 0
      %p65 = por %p63, %p64
      %s66 = ssub.s32 %s25, %s37
      %p67 = scmp.eq.s32.totalorder %s66, 0
      %s69 = sadd.s32 %s68, 1
      %s70 = scalar_select %p67, %s68, %s69
      %p73 = pneg %p67
      %p74 = scmp.eq.s32.totalorder %s18, 3
      %p75 = por %p73, %p74
      %p76 = scmp.ne.s32.totalorder %s68, %s71
      %p77 = scmp.eq.s32.totalorder %s18, 0
      %p78 = por %p76, %p77
      %p79 = scmp.ne.s32.totalorder %s68, %s71
      %p80 = scmp.eq.s32.totalorder %s23, 3
      %p81 = por %p79, %p80
      %p82 = scmp.ne.s32.totalorder %s71, %s72
      %p83 = scmp.eq.s32.totalorder %s23, 0
      %p84 = por %p82, %p83
      %p85 = scmp.ne.s32.totalorder %s71, %s72
      %p86 = scmp.eq.s32.totalorder %s24, 3
      %p87 = por %p85, %p86
      %p89 = scmp.ne.s32.totalorder %s72, %s88
      %p90 = scmp.eq.s32.totalorder %s24, 0
      %p91 = por %p89, %p90
      %s92 = ssub.s32 %s25, %s37
      %p93 = scmp.eq.s32.totalorder %s92, 0
      %s95 = sadd.s32 %s94, 1
      %s96 = scalar_select %p93, %s94, %s95
      %p99 = pneg %p93
      %p100 = scmp.eq.s32.totalorder %s18, 3
      %p101 = por %p99, %p100
      %p102 = scmp.ne.s32.totalorder %s94, %s97
      %p103 = scmp.eq.s32.totalorder %s18, 0
      %p104 = por %p102, %p103
      %p105 = scmp.ne.s32.totalorder %s94, %s97
      %p106 = scmp.eq.s32.totalorder %s23, 3
      %p107 = por %p105, %p106
      %p108 = scmp.ne.s32.totalorder %s97, %s98
      %p109 = scmp.eq.s32.totalorder %s23, 0
      %p110 = por %p108, %p109
      %p111 = scmp.ne.s32.totalorder %s97, %s98
      %p112 = scmp.eq.s32.totalorder %s24, 3
      %p113 = por %p111, %p112
      %p115 = scmp.ne.s32.totalorder %s98, %s114
      %p116 = scmp.eq.s32.totalorder %s24, 0
      %p117 = por %p115, %p116
      %s118 = ssub.s32 %s25, %s37
      %s119 = ssub.s32 %s26, %s33
      %s120 = sor.u32 %s118, %s119
      %p121 = scmp.eq.s32.totalorder %s120, 0
      %s123 = sadd.s32 %s122, 1
      %s124 = scalar_select %p121, %s122, %s123
      %p127 = pneg %p121
      %p128 = scmp.eq.s32.totalorder %s18, 3
      %p129 = por %p127, %p128
      %p130 = scmp.ne.s32.totalorder %s122, %s125
      %p131 = scmp.eq.s32.totalorder %s18, 0
      %p132 = por %p130, %p131
      %p133 = scmp.ne.s32.totalorder %s122, %s125
      %p134 = scmp.eq.s32.totalorder %s23, 3
      %p135 = por %p133, %p134
      %p136 = scmp.ne.s32.totalorder %s125, %s126
      %p137 = scmp.eq.s32.totalorder %s23, 0
      %p138 = por %p136, %p137
      %p139 = scmp.ne.s32.totalorder %s125, %s126
      %p140 = scmp.eq.s32.totalorder %s24, 3
      %p141 = por %p139, %p140
      %p143 = scmp.ne.s32.totalorder %s126, %s142
      %p144 = scmp.eq.s32.totalorder %s24, 0
      %p145 = por %p143, %p144
      %p146 = scmp.le.s32.totalorder 1, %s18
      %p147 = scmp.lt.s32.totalorder %s18, 5
      %p148 = pnand %p146, %p147
      %p149 = pneg %p148
      // Predicated region
      $region9: #{tpu_custom_call.1} parent=5 // pred_check
        _
      $region10: #{tpu_custom_call.1} parent=5 // pred_check_branch
        %151 = sbr.rel (%p148) target = $region12
      $region11: #{tpu_custom_call.1} parent=5 // pred_region
        %s152 = ssub.s32 %s18, 1
      $region12: #{tpu_custom_call.1} parent=5 // pred_fallthru
        _
      %p153 = scmp.lt.s32.totalorder %s18, 4
      // Predicated region
      $region13: #{tpu_custom_call.1} parent=5 // pred_check
        %p154 = pneg %p153
      $region14: #{tpu_custom_call.1} parent=5 // pred_check_branch
        %156 = sbr.rel (%p154) target = $region16
      $region15: #{tpu_custom_call.1} parent=5 // pred_region
        // Predicated region
        $region17: #{tpu_custom_call.1} parent=15 // pred_check
          %p157 = pneg %p52
        $region18: #{tpu_custom_call.1} parent=15 // pred_check_branch
          %159 = sbr.rel (%p157) target = $region20
        $region19: #{tpu_custom_call.1} parent=15 // pred_region
          %s160 = sand.u32 %s42, 1
          %s161 = scalar_lea.sflag [#allocation3], %s160
          %s162 = sand.u32 %s42, 1
          %s163 = smul.addr %s162, 2
          %s164 = scalar_lea.vmem [#allocation2], %s163
          %s166 = ssub.s32 32, 32
          %167 = vsyncadd %s161, %s166
          %s168 = smul.addr %s26, 4
          %s169 = sadd.s32 %s25, %s168
          %s170 = smul.addr %s169, 32
          %s171 = scalar_lea.hbm %s0, %s170
          %s173 = sshll.u32 %s164, 4
          %s174 = int_to_ptr.vmem [resolvable:$true] %s173
          %176 = dma.hbm_to_vmem [thread:$0]  %s171, 32, %s174, %s161
        $region20: #{tpu_custom_call.1} parent=15 // pred_fallthru
          _
        // Predicated region
        $region21: #{tpu_custom_call.1} parent=15 // pred_check
          %p177 = pneg %p78
        $region22: #{tpu_custom_call.1} parent=15 // pred_check_branch
          %179 = sbr.rel (%p177) target = $region24
        $region23: #{tpu_custom_call.1} parent=15 // pred_region
          %s180 = sand.u32 %s68, 1
          %s181 = scalar_lea.sflag [#allocation6], %s180
          %s182 = sand.u32 %s68, 1
          %s183 = smul.addr %s182, 32
          %s184 = scalar_lea.vmem [#allocation5], %s183
          %s186 = ssub.s32 512, 512
          %187 = vsyncadd %s181, %s186
          %s188 = smul.addr %s25, 4
          %s189 = smul.addr %s188, 128
          %s190 = scalar_lea.hbm %s1, %s189
          %s191 = sshll.u32 %s184, 4
          %s192 = int_to_ptr.vmem [resolvable:$true] %s191
          %197 = dma.hbm_to_vmem [thread:$0]  %s190, 512, %s192, %s181, 128, 128, 8
        $region24: #{tpu_custom_call.1} parent=15 // pred_fallthru
          _
        // Predicated region
        $region25: #{tpu_custom_call.1} parent=15 // pred_check
          %p198 = pneg %p104
        $region26: #{tpu_custom_call.1} parent=15 // pred_check_branch
          %200 = sbr.rel (%p198) target = $region28
        $region27: #{tpu_custom_call.1} parent=15 // pred_region
          %p201 = scmp.lt.s32.totalorder %s25, 3
          %s202 = scalar_select %p201, %s25, 3
          %s203 = scalar_lea.vmem %s2, %s202
        $region28: #{tpu_custom_call.1} parent=15 // pred_fallthru
          _
      $region16: #{tpu_custom_call.1} parent=5 // pred_fallthru
        _
      %p204 = scmp.le.s32.totalorder 1, %s18
      %p205 = scmp.lt.s32.totalorder %s18, 5
      %p206 = pnand %p204, %p205
      %p207 = pneg %p206
      // Predicated region
      $region29: #{tpu_custom_call.1} parent=5 // pred_check
        _
      $region30: #{tpu_custom_call.1} parent=5 // pred_check_branch
        %209 = sbr.rel (%p206) target = $region32
      $region31: #{tpu_custom_call.1} parent=5 // pred_region
        %s210 = ssub.s32 %s18, 1
        %s211 = sand.u32 %s45, 1
        %s212 = scalar_lea.sflag [#allocation3], %s211
        %s213 = sand.u32 %s45, 1
        %s214 = smul.addr %s213, 2
        %s215 = scalar_lea.vmem [#allocation2], %s214
        // Predicated region
        $region33: #{tpu_custom_call.1} parent=31 // pred_check
          %p216 = pneg %p58
        $region34: #{tpu_custom_call.1} parent=31 // pred_check_branch
          %218 = sbr.rel (%p216) target = $region36
        $region35: #{tpu_custom_call.1} parent=31 // pred_region
          %219 = dma.done %s212, 32
        $region36: #{tpu_custom_call.1} parent=31 // pred_fallthru
          _
        %s220 = sand.u32 %s71, 1
        %s221 = scalar_lea.sflag [#allocation6], %s220
        %s222 = sand.u32 %s71, 1
        %s223 = smul.addr %s222, 32
        %s224 = scalar_lea.vmem [#allocation5], %s223
        // Predicated region
        $region37: #{tpu_custom_call.1} parent=31 // pred_check
          %p225 = pneg %p84
        $region38: #{tpu_custom_call.1} parent=31 // pred_check_branch
          %227 = sbr.rel (%p225) target = $region40
        $region39: #{tpu_custom_call.1} parent=31 // pred_region
          %228 = dma.done %s221, 512
        $region40: #{tpu_custom_call.1} parent=31 // pred_fallthru
          _
        %s229 = sand.u32 %s45, 1
        %s230 = scalar_lea.sflag [#allocation3], %s229
        %s231 = sand.u32 %s45, 1
        %s232 = smul.addr %s231, 2
        %s233 = scalar_lea.vmem [#allocation2], %s232
        %p234 = pneg %p58
        %p235 = pneg %p55
        %s236 = sand.u32 %s71, 1
        %s237 = scalar_lea.sflag [#allocation6], %s236
        %s238 = sand.u32 %s71, 1
        %s239 = smul.addr %s238, 32
        %s240 = scalar_lea.vmem [#allocation5], %s239
        %p241 = pneg %p84
        %p242 = pneg %p81
        %p243 = scmp.lt.s32.totalorder %s27, 3
        %s244 = scalar_select %p243, %s27, 3
        %s245 = scalar_lea.vmem %s2, %s244
        %p246 = pneg %p110
        %p247 = pneg %p107
        %p248 = pneg %p138
        %p249 = pneg %p135
        %s250 = sand.u32 %s125, 1
        %s251 = scalar_lea.sflag [#allocation4], %s250
        %s252 = sand.u32 %s125, 1
        %s253 = smul.addr %s252, 2
        %s254 = scalar_lea.vmem [#allocation7], %s253
        %p255 = scmp.lt.s32.totalorder %s27, 3
        %s256 = scalar_select %p255, %s27, 3
        %s257 = scalar_lea.vmem %s2, %s256
        %v258 = vld [vmem:[%s215] sm:$0x3]
        %v259 = vld [vmem:[%s224] sm:$0xff]
        %v260 = vld [vmem:[%s224 + $0x8] sm:$0xff]
        %v261 = vld [vmem:[%s224 + $0x10] sm:$0xff]
        %v262 = vld [vmem:[%s224 + $0x18] sm:$0xff]
        %v263 = vld [vmem:[%s257] sm:$0x1]
        %v265 = vlaneseq
        %v266 = vshrl.u32 %v265, 7
        %v267 = vsub.s32 0, %v266
        %v268 = vrot.slane %v263, %v267
        %270 = vmatprep.subr.mxu0 0.0
        %271 = vmatpush1.xpose.msra.mxu0 %v259
        %272 = vmatprep.subr.mxu0 0.0
        %273 = vmatpush1.xpose.msra.mxu0 %v260
        %274 = vmatprep.subr.mxu0 0.0
        %275 = vmatpush1.xpose.msra.mxu0 %v261
        %276 = vmatprep.subr.mxu0 0.0
        %277 = vmatpush1.xpose.msra.mxu0 %v262
        %278 = vmatprep.subr.mxu0 0.0
        %279 = vmatpush1.xpose.msra.mxu0 0.0
        %280 = vmatprep.subr.mxu0 0.0
        %281 = vmatpush1.xpose.msra.mxu0 0.0
        %282 = vmatprep.subr.mxu0 0.0
        %283 = vmatpush1.xpose.msra.mxu0 0.0
        %284 = vmatprep.subr.mxu0 0.0
        %285 = vmatpush1.xpose.msra.mxu0 0.0
        %286 = vmatprep.subr.mxu0 0.0
        %287 = vmatpush1.xpose.msra.mxu0 0.0
        %288 = vmatprep.subr.mxu0 0.0
        %289 = vmatpush1.xpose.msra.mxu0 0.0
        %290 = vmatprep.subr.mxu0 0.0
        %291 = vmatpush1.xpose.msra.mxu0 0.0
        %292 = vmatprep.subr.mxu0 0.0
        %293 = vmatpush1.xpose.msra.mxu0 0.0
        %294 = vmatprep.subr.mxu0 0.0
        %295 = vmatpush1.xpose.msra.mxu0 0.0
        %296 = vmatprep.subr.mxu0 0.0
        %297 = vmatpush1.xpose.msra.mxu0 0.0
        %298 = vmatprep.subr.mxu0 0.0
        %299 = vmatpush1.xpose.msra.mxu0 0.0
        %300 = vmatprep.subr.mxu0 0.0
        %301 = vmatpush1.xpose.msra.mxu0 0.0
        %302 = vmatprep.subr.mxu0 0.0
        %303 = vmatpush1.xpose.msra.mxu0 0.0
        %304 = vmatprep.subr.mxu0 0.0
        %305 = vmatpush1.xpose.msra.mxu0 0.0
        %306 = vmatprep.subr.mxu0 0.0
        %307 = vmatpush1.xpose.msra.mxu0 0.0
        %308 = vmatprep.subr.mxu0 0.0
        %309 = vmatpush1.xpose.msra.mxu0 0.0
        %310 = vmatprep.subr.mxu0 0.0
        %311 = vmatpush1.xpose.msra.mxu0 0.0
        %312 = vmatprep.subr.mxu0 0.0
        %313 = vmatpush1.xpose.msra.mxu0 0.0
        %314 = vmatprep.subr.mxu0 0.0
        %315 = vmatpush1.xpose.msra.mxu0 0.0
        %316 = vmatprep.subr.mxu0 0.0
        %317 = vmatpush1.xpose.msra.mxu0 0.0
        %318 = vmatprep.subr.mxu0 0.0
        %319 = vmatpush1.xpose.msra.mxu0 0.0
        %320 = vmatprep.subr.mxu0 0.0
        %321 = vmatpush1.xpose.msra.mxu0 0.0
        %322 = vmatprep.subr.mxu0 0.0
        %323 = vmatpush1.xpose.msra.mxu0 0.0
        %324 = vmatprep.subr.mxu0 0.0
        %325 = vmatpush1.xpose.msra.mxu0 0.0
        %326 = vmatprep.subr.mxu0 0.0
        %327 = vmatpush1.xpose.msra.mxu0 0.0
        %328 = vmatprep.subr.mxu0 0.0
        %329 = vmatpush1.xpose.msra.mxu0 0.0
        %330 = vmatprep.subr.mxu0 0.0
        %331 = vmatpush1.xpose.msra.mxu0 0.0
        %332 = vmatprep.subr.mxu0 0.0
        %333 = vmatpush1.xpose.msra.mxu0 0.0
        %334 = vmatprep.mubr.f32.mxu0 0.0
        %335 = vmatmul.mubr.f32.gmra.mrb[0].mxu0 %v258
        %v336 = vpop.f32.mrb[0].mxu0
        %v337 = vadd.f32 %v268, %v336
        %v338 = vpop.f32.mrb[0].mxu0
        %339 = vdwg.mxu0
        %vm340 = vcmask 254976
        %341 = vst.msk [vmem:[%s254] sm:$0x3] %vm340, %v337
        %s342 = sand.u32 %s125, 1
        %s343 = scalar_lea.sflag [#allocation4], %s342
        %s344 = sand.u32 %s125, 1
        %s345 = smul.addr %s344, 2
        %s346 = scalar_lea.vmem [#allocation7], %s345
        // Predicated region
        $region41: #{tpu_custom_call.1} parent=31 // pred_check
          %p347 = pneg %p135
        $region42: #{tpu_custom_call.1} parent=31 // pred_check_branch
          %349 = sbr.rel (%p347) target = $region44
        $region43: #{tpu_custom_call.1} parent=31 // pred_region
          %s351 = ssub.s32 32, 32
          %352 = vsyncadd %s343, %s351
          %s353 = sadd.s32 %s28, %s27
          %s354 = smul.addr %s353, 32
          %s355 = scalar_lea.hbm %s3, %s354
          %s357 = sshll.u32 %s346, 4
          %s358 = int_to_ptr.vmem [resolvable:$true] %s357
          %360 = dma.vmem_to_hbm [thread:$0]  %s358, 32, %s355, %s343
        $region44: #{tpu_custom_call.1} parent=31 // pred_fallthru
          _
      $region32: #{tpu_custom_call.1} parent=5 // pred_fallthru
        _
      %p361 = scmp.le.s32.totalorder 2, %s18
      // Predicated region
      $region45: #{tpu_custom_call.1} parent=5 // pred_check
        %p362 = pneg %p361
      $region46: #{tpu_custom_call.1} parent=5 // pred_check_branch
        %364 = sbr.rel (%p362) target = $region48
      $region47: #{tpu_custom_call.1} parent=5 // pred_region
        %s365 = ssub.s32 %s18, 2
        // Predicated region
        $region49: #{tpu_custom_call.1} parent=47 // pred_check
          %p366 = pneg %p141
        $region50: #{tpu_custom_call.1} parent=47 // pred_check_branch
          %368 = sbr.rel (%p366) target = $region52
        $region51: #{tpu_custom_call.1} parent=47 // pred_region
          %s369 = sand.u32 %s126, 1
          %s370 = scalar_lea.sflag [#allocation4], %s369
          %s371 = sand.u32 %s126, 1
          %s372 = smul.addr %s371, 2
          %s373 = scalar_lea.vmem [#allocation7], %s372
          %374 = dma.done %s370, 32
        $region52: #{tpu_custom_call.1} parent=47 // pred_fallthru
          _
      $region48: #{tpu_custom_call.1} parent=5 // pred_fallthru
        _
    $region6: #{tpu_custom_call.1} parent=1 // loop_footer
      %s22 = sadd.s32 1, %s18
    $region7: #{tpu_custom_call.1} parent=1 // loop_footer_branch
      %17 = sbr.rel target = $region3
    $region8: #{tpu_custom_call.1} parent=1 // loop_exit
      _
    %375 = vsyncpa [#allocation3], 1
    %s376 = scalar_lea.sflag [#allocation3], 1
    %377 = vsyncpa %s376, 1
    %378 = vsyncpa [#allocation6], 1
    %s379 = scalar_lea.sflag [#allocation6], 1
    %380 = vsyncpa %s379, 1
    %381 = vsyncpa [#allocation4], 1
    %s382 = scalar_lea.sflag [#allocation4], 1
    %383 = vsyncpa %s382, 1

</llo_original>
